<compile_context>
chip_gen: v6e
topology: v6e:2x2x1
jax: 0.10.0
libtpu: 0.0.40
codegen_flags: <defaults>
</compile_context>

<pallas_src>
import functools

import jax
import jax.numpy as jnp
from jax.experimental import pallas as pl
from jax.experimental.pallas import tpu as pltpu


# ----------------------------- config (small) -----------------------------
BATCH = 2
CHANNELS = 4          # config.num_channels
IMAGE_SIZE = 16       # config.image_size
PATCH = 4             # config.patch_size
HIDDEN = 32           # config.hidden_size (embed_dim)

GRID_HW = IMAGE_SIZE // PATCH          # 4 patches per side
NUM_PATCHES = GRID_HW * GRID_HW        # 16 == num_positions
PATCH_DIM = CHANNELS * PATCH * PATCH   # 64 features per patch (K)
LANE = 128                             # TPU vreg lane width


# ----------------------------- Pallas kernel ------------------------------
def vision_embeddings_kernel(patches_ref, w_ref, posb_ref, o_ref):
    """Single invocation; everything VMEM-resident.

    patches_ref: [B*Np, K]    im2col'd pixel patches (rows)
    w_ref:       [K, Dpad]    conv weight, flattened + transposed + lane-padded
    posb_ref:    [Np, Dpad]   position table with conv bias pre-folded in
    o_ref:       [B, Np, Dpad] output embeddings
    """
    B, Np, Dp = o_ref.shape
    # Conv2d(kernel=stride=P, 'valid') == one MXU matmul over all patches of
    # all batch elements (M = B*Np).
    y = jnp.dot(patches_ref[...], w_ref[...],
                preferred_element_type=jnp.float32)
    # Split M back into (B, Np): sublane-only retiling (last dim untouched,
    # Np is a multiple of 8), then broadcast-add the fused pos+bias table.
    y = y.reshape(B, Np, Dp) + posb_ref[...]
    # Lane-dense (Dpad = multiple of 128) unmasked store.
    o_ref[...] = y.astype(o_ref.dtype)


# ------------------- one-time parameter preparation ------------------------
def prepare_params(conv_w, conv_b, pos_table, lane=LANE):
    """Model-load-time layout prep (NOT part of the per-forward path):
    flatten + transpose the conv weight to [K, D], fold the conv bias into the
    position table, and zero-pad the embed dim to a lane-dense multiple of 128.
    """
    D, C, P, _ = conv_w.shape
    K = C * P * P
    w_flat = conv_w.reshape(D, K).T                                   # [K, D]
    posb = (pos_table.astype(jnp.float32)
            + conv_b[None, :].astype(jnp.float32)).astype(conv_w.dtype)
    d_pad = ((D + lane - 1) // lane) * lane
    if d_pad != D:
        w_flat = jnp.pad(w_flat, ((0, 0), (0, d_pad - D)))
        posb = jnp.pad(posb, ((0, 0), (0, d_pad - D)))
    return w_flat, posb


# ----------------------------- forward wrapper -----------------------------
def siglip_vision_embeddings(pixel_values, w_flat, posb, *,
                             patch_size, hidden_size):
    """pixel_values: [B, C, H, W]; w_flat: [C*P*P, Dpad] (pre-transposed);
    posb: [num_patches, Dpad] (pos table + bias). Returns [B, num_patches, D].
    """
    B, C, H, W = pixel_values.shape
    P = patch_size
    assert H % P == 0 and W % P == 0, "image size must be divisible by patch"
    gh, gw = H // P, W // P
    Np = gh * gw
    K, d_pad = w_flat.shape
    assert K == C * P * P and posb.shape == (Np, d_pad)

    # target_dtype cast (pixel_values.to(weight.dtype) in the module).
    pixel_values = pixel_values.astype(w_flat.dtype)

    # im2col: [B,C,H,W] -> [B, gh, gw, C, P, P] -> [B*Np, C*P*P].
    # Row order (gh, gw) matches flatten(2).transpose(1,2); feature order
    # (C, P, P) matches the conv-weight flattening.  Zero FLOPs.
    patches = pixel_values.reshape(B, C, gh, P, gw, P)
    patches = patches.transpose(0, 2, 4, 1, 3, 5)
    patches = patches.reshape(B * Np, K)
    # TODO(synk): at production image sizes, fold this im2col into the kernel
    # (per-patch-row BlockSpec over an Np-tile grid) to avoid the extra HBM
    # pass; at this VMEM-resident toy size a grid-less single matmul wins.

    out = pl.pallas_call(
        vision_embeddings_kernel,
        out_shape=jax.ShapeDtypeStruct((B, Np, d_pad), w_flat.dtype),
        in_specs=[
            pl.BlockSpec(memory_space=pltpu.MemorySpace.VMEM),  # patches
            pl.BlockSpec(memory_space=pltpu.MemorySpace.VMEM),  # weight
            pl.BlockSpec(memory_space=pltpu.MemorySpace.VMEM),  # pos + bias
        ],
        out_specs=pl.BlockSpec(memory_space=pltpu.MemorySpace.VMEM),
    )(patches, w_flat, posb)

    # Slice off the lane padding (no-op when hidden_size % 128 == 0).
    return out[..., :hidden_size]


# ----------------------------- pure-JAX reference --------------------------
def _ref(pixel_values, conv_w, conv_b, pos_table):
    out = jax.lax.conv_general_dilated(
        pixel_values.astype(conv_w.dtype), conv_w,
        window_strides=(PATCH, PATCH),
        padding="VALID",
        dimension_numbers=("NCHW", "OIHW", "NCHW"))
    out = out + conv_b.reshape(1, -1, 1, 1)
    B, D, gh, gw = out.shape
    emb = out.reshape(B, D, gh * gw).transpose(0, 2, 1)   # flatten(2).T(1,2)
    return emb + pos_table[None]                          # + position_embedding


# ----------------------------- main ----------------------------------------
if __name__ == "__main__":
    key = jax.random.PRNGKey(0)
    k_px, k_w, k_b, k_pos = jax.random.split(key, 4)

    pixel_values = jax.random.normal(
        k_px, (BATCH, CHANNELS, IMAGE_SIZE, IMAGE_SIZE), jnp.float32)
    conv_w = 0.02 * jax.random.normal(
        k_w, (HIDDEN, CHANNELS, PATCH, PATCH), jnp.float32)
    conv_b = 0.02 * jax.random.normal(k_b, (HIDDEN,), jnp.float32)
    pos_table = 0.02 * jax.random.normal(
        k_pos, (NUM_PATCHES, HIDDEN), jnp.float32)

    # One-time parameter prep (model-load time), outside the forward path.
    w_flat, posb = jax.block_until_ready(
        prepare_params(conv_w, conv_b, pos_table))

    fwd = jax.jit(functools.partial(
        siglip_vision_embeddings, patch_size=PATCH, hidden_size=HIDDEN))
    out = jax.block_until_ready(fwd(pixel_values, w_flat, posb))

    ref = _ref(pixel_values, conv_w, conv_b, pos_table)
    assert out.shape == (BATCH, NUM_PATCHES, HIDDEN)
    assert jnp.allclose(out, ref, rtol=1e-4, atol=1e-5), "mismatch vs reference"

    print("KERNEL_OK")
</pallas_src>

<mosaic_0001>
module attributes {stable_mosaic.version = 11 : i64} {
  func.func @vision_embeddings_kernel(%arg0: memref<32x64xf32, #tpu.memory_space<vmem>>, %arg1: memref<64x128xf32, #tpu.memory_space<vmem>>, %arg2: memref<16x128xf32, #tpu.memory_space<vmem>>, %arg3: memref<2x16x128xf32, #tpu.memory_space<vmem>>) attributes {dimension_semantics = [], scalar_prefetch = 0 : i64, scratch_operands = 0 : i64, tpu.core_type = #tpu.core_type<tc>} {
    %c0 = arith.constant 0 : index
    %c0_0 = arith.constant 0 : index
    %0 = vector.load %arg0[%c0, %c0_0] : memref<32x64xf32, #tpu.memory_space<vmem>>, vector<32x64xf32>
    %c0_1 = arith.constant 0 : index
    %c0_2 = arith.constant 0 : index
    %1 = vector.load %arg1[%c0_1, %c0_2] : memref<64x128xf32, #tpu.memory_space<vmem>>, vector<64x128xf32>
    %cst = arith.constant dense<0.000000e+00> : vector<32x128xf32>
    %2 = tpu.matmul %0, %1, %cst {dimension_numbers = #tpu.dot_dimension_numbers<[1], [0], [0], [1], [0, 0, 1, 1], [], []>} : vector<32x64xf32>, vector<64x128xf32>, vector<32x128xf32> -> vector<32x128xf32>
    %3 = vector.shape_cast %2 : vector<32x128xf32> to vector<2x16x128xf32>
    %c0_3 = arith.constant 0 : index
    %c0_4 = arith.constant 0 : index
    %4 = vector.load %arg2[%c0_3, %c0_4] : memref<16x128xf32, #tpu.memory_space<vmem>>, vector<16x128xf32>
    %5 = vector.shape_cast %4 : vector<16x128xf32> to vector<1x16x128xf32>
    %6 = vector.broadcast %5 : vector<1x16x128xf32> to vector<2x16x128xf32>
    %7 = arith.addf %3, %6 : vector<2x16x128xf32>
    %c0_5 = arith.constant 0 : index
    %c0_6 = arith.constant 0 : index
    %c0_7 = arith.constant 0 : index
    %8 = vector.load %arg3[%c0_5, %c0_6, %c0_7] : memref<2x16x128xf32, #tpu.memory_space<vmem>>, vector<2x16x128xf32>
    tpu.vector_store %arg3[%c0_5, %c0_6, %c0_7], %7 {strides = array<i32>} : memref<2x16x128xf32, #tpu.memory_space<vmem>>, vector<2x16x128xf32>,
    return
  }
}

</mosaic_0001>

<llo_original>
// kernel: siglip_vision_embeddings.1
$region0: #{siglip_vision_embeddings.1}
  #allocation0 [shape = 'u32[]', space=smem, size = 0x4, offset = 0x4, fixed_abs, tag = 'smem constant byte address 0x4 - core index']
  #allocation1 [shape = 'u32[144,128]{1,0:T(1,128)}', space=vmem, size = 0x12000, scoped, tag = 'internal scratch']
  %s0 = inlined_call_operand.vmem [shape: f32[32,64], index: 0, kind: input, shape index: {}]
  %s1 = inlined_call_operand.vmem [shape: f32[64,128], index: 1, kind: input, shape index: {}]
  %s2 = inlined_call_operand.vmem [shape: f32[16,128], index: 2, kind: input, shape index: {}]
  %s3 = inlined_call_operand.hbm [shape: f32[2,16,128], index: 3, kind: output, shape index: {}]
  %s4 = sld [smem:[#allocation0]]
  $region22: #{siglip_vision_embeddings.1} parent=0
    _
  %s6 = ssub.s32 1, %s4
  %s7 = scalar_select 0, %s6, %s4
  $region1: #{siglip_vision_embeddings.1} parent=0
    #allocation2 [shape = 'u8[16384]{0}', space=vmem, size = 0x4000, scoped, tag = 'output window, operand 0, single buffered']
    #allocation3 [shape = 's32[1]{0}', space=sflag, size = 0x4, scoped, tag = 'scoped memory for siglip_vision_embeddings.1']
    %8 = vsyncpa [#allocation3], 0
    // Predicated region
    $region2: #{siglip_vision_embeddings.1} parent=1 // pred_check
      _
    $region3: #{siglip_vision_embeddings.1} parent=1 // pred_check_branch
      %10 = sbr.rel (0) target = $region5
    $region4: #{siglip_vision_embeddings.1} parent=1 // pred_region
      _
    $region5: #{siglip_vision_embeddings.1} parent=1 // pred_fallthru
      _
    // Predicated region
    $region6: #{siglip_vision_embeddings.1} parent=1 // pred_check
      _
    $region7: #{siglip_vision_embeddings.1} parent=1 // pred_check_branch
      %12 = sbr.rel (0) target = $region9
    $region8: #{siglip_vision_embeddings.1} parent=1 // pred_region
      _
    $region9: #{siglip_vision_embeddings.1} parent=1 // pred_fallthru
      _
    // Predicated region
    $region10: #{siglip_vision_embeddings.1} parent=1 // pred_check
      _
    $region11: #{siglip_vision_embeddings.1} parent=1 // pred_check_branch
      %14 = sbr.rel (0) target = $region13
    $region12: #{siglip_vision_embeddings.1} parent=1 // pred_region
      _
    $region13: #{siglip_vision_embeddings.1} parent=1 // pred_fallthru
      _
    %v15 = vld [vmem:[%s0] sm:$0xff]
    %v16 = vld [vmem:[%s0 + $0x8] sm:$0xff]
    %v17 = vld [vmem:[%s0 + $0x10] sm:$0xff]
    %v18 = vld [vmem:[%s0 + $0x18] sm:$0xff]
    %v19 = vld [vmem:[%s1] sm:$0xff]
    %v20 = vld [vmem:[%s1 + $0x8] sm:$0xff]
    %v21 = vld [vmem:[%s1 + $0x10] sm:$0xff]
    %v22 = vld [vmem:[%s1 + $0x18] sm:$0xff]
    %v23 = vld [vmem:[%s1 + $0x20] sm:$0xff]
    %v24 = vld [vmem:[%s1 + $0x28] sm:$0xff]
    %v25 = vld [vmem:[%s1 + $0x30] sm:$0xff]
    %v26 = vld [vmem:[%s1 + $0x38] sm:$0xff]
    %vm27 = vcmask 523264
    %v29 = vsel %vm27, %v15, 0
    %v32 = vsel %vm27, %v16, 0
    %v35 = vsel %vm27, %v17, 0
    %v38 = vsel %vm27, %v18, 0
    %40 = vmatprep.subr.mxu0 0.0
    %41 = vmatpush1.msra.mxu0 0.0
    %42 = vmatprep.subr.mxu0 0.0
    %43 = vmatpush1.msra.mxu0 0.0
    %44 = vmatprep.subr.mxu0 0.0
    %45 = vmatpush1.msra.mxu0 0.0
    %46 = vmatprep.subr.mxu0 0.0
    %47 = vmatpush1.msra.mxu0 0.0
    %48 = vmatprep.subr.mxu0 0.0
    %49 = vmatpush1.msra.mxu0 0.0
    %50 = vmatprep.subr.mxu0 0.0
    %51 = vmatpush1.msra.mxu0 0.0
    %52 = vmatprep.subr.mxu0 0.0
    %53 = vmatpush1.msra.mxu0 0.0
    %54 = vmatprep.subr.mxu0 0.0
    %55 = vmatpush1.msra.mxu0 0.0
    %56 = vmatprep.subr.mxu0 0.0
    %57 = vmatpush1.msra.mxu0 %v26
    %58 = vmatprep.subr.mxu0 0.0
    %59 = vmatpush1.msra.mxu0 %v25
    %60 = vmatprep.subr.mxu0 0.0
    %61 = vmatpush1.msra.mxu0 %v24
    %62 = vmatprep.subr.mxu0 0.0
    %63 = vmatpush1.msra.mxu0 %v23
    %64 = vmatprep.subr.mxu0 0.0
    %65 = vmatpush1.msra.mxu0 %v22
    %66 = vmatprep.subr.mxu0 0.0
    %67 = vmatpush1.msra.mxu0 %v21
    %68 = vmatprep.subr.mxu0 0.0
    %69 = vmatpush1.msra.mxu0 %v20
    %70 = vmatprep.subr.mxu0 0.0
    %71 = vmatpush1.msra.mxu0 %v19
    %72 = vmatprep.subr.mxu0 0.0
    %73 = vmatpush2.msra.mxu0 0.0
    %74 = vmatprep.subr.mxu0 0.0
    %75 = vmatpush2.msra.mxu0 0.0
    %76 = vmatprep.subr.mxu0 0.0
    %77 = vmatpush2.msra.mxu0 0.0
    %78 = vmatprep.subr.mxu0 0.0
    %79 = vmatpush2.msra.mxu0 0.0
    %80 = vmatprep.subr.mxu0 0.0
    %81 = vmatpush2.msra.mxu0 0.0
    %82 = vmatprep.subr.mxu0 0.0
    %83 = vmatpush2.msra.mxu0 0.0
    %84 = vmatprep.subr.mxu0 0.0
    %85 = vmatpush2.msra.mxu0 0.0
    %86 = vmatprep.subr.mxu0 0.0
    %87 = vmatpush2.msra.mxu0 0.0
    %88 = vmatprep.subr.mxu0 0.0
    %89 = vmatpush2.msra.mxu0 0.0
    %90 = vmatprep.subr.mxu0 0.0
    %91 = vmatpush2.msra.mxu0 0.0
    %92 = vmatprep.subr.mxu0 0.0
    %93 = vmatpush2.msra.mxu0 0.0
    %94 = vmatprep.subr.mxu0 0.0
    %95 = vmatpush2.msra.mxu0 0.0
    %96 = vmatprep.subr.mxu0 0.0
    %97 = vmatpush2.msra.mxu0 0.0
    %98 = vmatprep.subr.mxu0 0.0
    %99 = vmatpush2.msra.mxu0 0.0
    %100 = vmatprep.subr.mxu0 0.0
    %101 = vmatpush2.msra.mxu0 0.0
    %102 = vmatprep.subr.mxu0 0.0
    %103 = vmatpush2.msra.mxu0 0.0
    %104 = vmatprep.mubr.f32.mxu0 0.0
    %105 = vmatmul.mubr.f32.gmra.mxu0 %v29
    %v106 = vpop.f32.mrf.mxu0
    %v107 = vadd.f32 0.0, %v106
    %v108 = vpop.f32.mrf.mxu0
    %109 = vmatprep.mubr.f32.mxu0 0.0
    %110 = vmatmul.mubr.f32.gmra.mxu0 %v32
    %v111 = vpop.f32.mrf.mxu0
    %v112 = vadd.f32 0.0, %v111
    %v113 = vpop.f32.mrf.mxu0
    %114 = vmatprep.mubr.f32.mxu0 0.0
    %115 = vmatmul.mubr.f32.gmra.mxu0 %v35
    %v116 = vpop.f32.mrf.mxu0
    %v117 = vadd.f32 0.0, %v116
    %v118 = vpop.f32.mrf.mxu0
    %119 = vmatprep.mubr.f32.mxu0 0.0
    %120 = vmatmul.mubr.f32.gmra.mxu0 %v38
    %v121 = vpop.f32.mrf.mxu0
    %v122 = vadd.f32 0.0, %v121
    %v123 = vpop.f32.mrf.mxu0
    %124 = vdwg.mxu0
    %v125 = vld [vmem:[%s2] sm:$0xff]
    %v126 = vld [vmem:[%s2 + $0x8] sm:$0xff]
    %v127 = vadd.f32 %v107, %v125
    %v128 = vadd.f32 %v112, %v126
    %v129 = vadd.f32 %v117, %v125
    %v130 = vadd.f32 %v122, %v126
    %131 = vst [vmem:[#allocation2] sm:$0xff] %v127
    %132 = vst [vmem:[#allocation2 + $0x8] sm:$0xff] %v128
    %133 = vst [vmem:[#allocation2 + $0x10] sm:$0xff] %v129
    %134 = vst [vmem:[#allocation2 + $0x18] sm:$0xff] %v130
    // Predicated region
    $region14: #{siglip_vision_embeddings.1} parent=1 // pred_check
      _
    $region15: #{siglip_vision_embeddings.1} parent=1 // pred_check_branch
      %136 = sbr.rel (0) target = $region17
    $region16: #{siglip_vision_embeddings.1} parent=1 // pred_region
      %s138 = ssub.s32 512, 512
      %139 = vsyncadd [#allocation3], %s138
      %s140 = sshll.u32 [#allocation2], 4
      %s141 = int_to_ptr.vmem [resolvable:$true] %s140
      %146 = dma.vmem_to_hbm [thread:$0]  %s141, 512, %s3, [#allocation3], 128, 128, 8
    $region17: #{siglip_vision_embeddings.1} parent=1 // pred_fallthru
      _
    // Predicated region
    $region18: #{siglip_vision_embeddings.1} parent=1 // pred_check
      _
    $region19: #{siglip_vision_embeddings.1} parent=1 // pred_check_branch
      %148 = sbr.rel (0) target = $region21
    $region20: #{siglip_vision_embeddings.1} parent=1 // pred_region
      %149 = dma.done [#allocation3], 512
    $region21: #{siglip_vision_embeddings.1} parent=1 // pred_fallthru
      _
    %150 = vsyncpa [#allocation3], 1

</llo_original>
